<compile_context>
chip_gen: v7x
topology: tpu7x:2x2x1
jax: 0.10.0
libtpu: 0.0.40
codegen_flags: <defaults>
</compile_context>

<pallas_src>
import functools
import math

import jax
import jax.numpy as jnp
from jax.experimental import pallas as pl
from jax.experimental.pallas import tpu as pltpu

BN_EPS = 1e-5
WEIGHT_DTYPE = jnp.bfloat16   # matmul operand dtype; BN/ReLU math stays f32


# ----------------------------------------------------------------------------
# Block math: train-mode BatchNorm1d (+ReLU) with the affine folded into 1 FMA
# ----------------------------------------------------------------------------
def _bn_relu(z, gamma, beta, inv_b):
    # Single-pass batch statistics (biased variance, like torch training mode).
    # TODO(synk): E[z^2]-mean^2 can lose precision when |mean| >> std; switch
    # to a two-pass centered variance if bit-closeness to torch is required.
    mean = jnp.sum(z, axis=0, keepdims=True) * inv_b                 # [1, h]
    var = jnp.maximum(
        jnp.sum(z * z, axis=0, keepdims=True) * inv_b - mean * mean, 0.0)
    scale = gamma * jax.lax.rsqrt(var + BN_EPS)                      # EUP rsqrt
    shift = beta - mean * scale                                      # [1, h]
    return jnp.maximum(z * scale + shift, 0.0)                       # FMA + ReLU
    # TODO(synk): only 'relu' activation implemented (not softplus/lrelu).


# ----------------------------------------------------------------------------
# Fused kernels: entire encoder forward in one pallas_call
# ----------------------------------------------------------------------------
def _fused_encoder_kernel_stacked(num_blocks, x_ref, w0_ref, wr_ref, gb_ref,
                                  wh_ref, bh_ref, out_ref):
    """Uniform hidden widths: inner weights stacked [nb-1,h,h], gb [2*nb,h]."""
    h = x_ref[...]                                    # [B, in]  f32
    inv_b = 1.0 / h.shape[0]
    gb = gb_ref[...]                                  # [2*nb, h] f32 (tiny)
    for i in range(num_blocks):
        w = w0_ref[...] if i == 0 else wr_ref[i - 1]  # static leading index
        z = jnp.dot(h.astype(w.dtype), w, preferred_element_type=jnp.float32)
        h = _bn_relu(z, gb[2 * i:2 * i + 1, :], gb[2 * i + 1:2 * i + 2, :],
                     inv_b)
    out_ref[...] = (jnp.dot(h.astype(wh_ref.dtype), wh_ref[...],
                            preferred_element_type=jnp.float32) + bh_ref[...])


def _fused_encoder_kernel_list(num_blocks, *refs):
    """Fallback for non-uniform hidden widths (parameters cannot be stacked)."""
    x_ref = refs[0]
    out_ref = refs[-1]
    h = x_ref[...]
    inv_b = 1.0 / h.shape[0]
    idx = 1
    for _ in range(num_blocks):
        w_ref, gb_ref = refs[idx], refs[idx + 1]
        idx += 2
        z = jnp.dot(h.astype(w_ref.dtype), w_ref[...],
                    preferred_element_type=jnp.float32)
        gb = gb_ref[...]                              # [2, h]
        h = _bn_relu(z, gb[0:1, :], gb[1:2, :], inv_b)
    wh_ref, bh_ref = refs[idx], refs[idx + 1]
    out_ref[...] = (jnp.dot(h.astype(wh_ref.dtype), wh_ref[...],
                            preferred_element_type=jnp.float32) + bh_ref[...])


def _vmem():
    return pl.BlockSpec(memory_space=pltpu.MemorySpace.VMEM)


def _nbytes(a):
    return a.size * a.dtype.itemsize


# ----------------------------------------------------------------------------
# Wrapper
# ----------------------------------------------------------------------------
@functools.partial(jax.jit, static_argnames=("latent_dim",))
def mlp_encoder_forward(params, x, *, latent_dim):
    w_head, b_head = params["head"]                   # [h_last, pad] bf16, [1, pad] f32
    B = x.shape[0]
    out_pad = b_head.shape[1]

    if "w_rest" in params:                            # stacked (uniform widths)
        num_blocks = params["gb"].shape[0] // 2
        flat = [x, params["w0"], params["w_rest"], params["gb"], w_head, b_head]
        kernel = functools.partial(_fused_encoder_kernel_stacked, num_blocks)
        hidden_dims = [params["w0"].shape[1]] * num_blocks
    else:                                             # fallback
        blocks = params["blocks"]
        num_blocks = len(blocks)
        flat = [x]
        for (w, gb) in blocks:
            flat.extend([w, gb])
        flat.extend([w_head, b_head])
        kernel = functools.partial(_fused_encoder_kernel_list, num_blocks)
        hidden_dims = [w.shape[1] for (w, _) in blocks]

    # --- VMEM budget: params + activations stay fully resident (no grid) ----
    max_h = max(hidden_dims + [x.shape[1], out_pad])
    resident = (sum(_nbytes(a) for a in flat)         # all inputs
                + B * out_pad * 4                     # output
                + 6 * B * max_h * 4)                  # live f32 temporaries
    if resident > (48 << 20):
        # TODO(synk): large-B path (batch-tiled grid + two-sweep BN across an
        # 'arbitrary' axis, megacore split) not implemented.
        raise ValueError("batch too large for the whole-batch-resident kernel")
    vmem_limit = min(int(resident * 1.5) + (4 << 20), 64 << 20)

    # --- advisory cost estimate so XLA schedules around the custom call -----
    flops = 0
    k = x.shape[1]
    for h_dim in hidden_dims:
        flops += 2 * B * k * h_dim
        k = h_dim
    flops += 2 * B * k * out_pad
    cost = pl.CostEstimate(
        flops=flops,
        transcendentals=sum(hidden_dims),             # one rsqrt per feature/block
        bytes_accessed=sum(_nbytes(a) for a in flat) + B * out_pad * 4)

    out = pl.pallas_call(
        kernel,
        out_shape=jax.ShapeDtypeStruct((B, out_pad), jnp.float32),
        in_specs=[_vmem()] * len(flat),
        out_specs=_vmem(),
        compiler_params=pltpu.CompilerParams(vmem_limit_bytes=vmem_limit),
        cost_estimate=cost,
    )(*flat)

    mu = out[:, :latent_dim]
    log_var = out[:, latent_dim:2 * latent_dim]
    return mu, log_var


# ----------------------------------------------------------------------------
# Parameter init (torch.nn.Linear-style uniform init; weights stored [in, out])
# ----------------------------------------------------------------------------
def init_linear(key, in_dim, out_dim):
    kw, kb = jax.random.split(key)
    bound = 1.0 / math.sqrt(in_dim)
    w = jax.random.uniform(kw, (in_dim, out_dim), jnp.float32, -bound, bound)
    b = jax.random.uniform(kb, (1, out_dim), jnp.float32, -bound, bound)
    return w, b


def init_mlp_encoder(key, in_channels, latent_dim, n_channels):
    n_channels = list(n_channels)
    weights, gbs = [], []
    dims_in = in_channels
    for h_dim in n_channels:
        key, sub = jax.random.split(key)
        w, _ = init_linear(sub, dims_in, h_dim)
        # Linear bias omitted on purpose: BatchNorm mean subtraction cancels
        # any per-feature constant -> dead compute / dead parameters.
        gamma = jnp.ones((1, h_dim), jnp.float32)     # BatchNorm1d weight
        beta = jnp.zeros((1, h_dim), jnp.float32)     # BatchNorm1d bias
        weights.append(w.astype(WEIGHT_DTYPE))
        gbs.append(jnp.concatenate([gamma, beta], axis=0))   # [2, h]
        dims_in = h_dim
    # TODO(synk): BatchNorm running_mean/running_var (eval-mode stats) are not
    # tracked; this reproduces the training-mode forward only.

    key, k_mu = jax.random.split(key)
    key, k_lv = jax.random.split(key)
    w_mu, b_mu = init_linear(k_mu, n_channels[-1], latent_dim)
    w_lv, b_lv = init_linear(k_lv, n_channels[-1], latent_dim)

    # Fuse the two heads along output features and zero-pad lanes to a multiple
    # of 128 so the head matmul writes one lane-dense slab.
    two_l = 2 * latent_dim
    pad = max(((two_l + 127) // 128) * 128, 128)
    w_head = jnp.zeros((n_channels[-1], pad), jnp.float32)
    w_head = w_head.at[:, :latent_dim].set(w_mu)
    w_head = w_head.at[:, latent_dim:two_l].set(w_lv)
    b_head = jnp.zeros((1, pad), jnp.float32)
    b_head = b_head.at[:, :latent_dim].set(b_mu[0])
    b_head = b_head.at[:, latent_dim:two_l].set(b_lv[0])
    head = (w_head.astype(WEIGHT_DTYPE), b_head)

    uniform = len(set(n_channels)) == 1 and len(n_channels) >= 2
    if uniform:
        return {"w0": weights[0],                               # [in, h]    bf16
                "w_rest": jnp.stack(weights[1:], axis=0),       # [nb-1,h,h] bf16
                "gb": jnp.concatenate(gbs, axis=0),             # [2*nb, h]  f32
                "head": head}
    return {"blocks": list(zip(weights, gbs)), "head": head}


# ----------------------------------------------------------------------------
if __name__ == "__main__":
    key = jax.random.PRNGKey(0)
    k_params, k_x = jax.random.split(key)

    B = 8             # batch (>=2 required for meaningful batch statistics)
    in_channels = 64
    latent_dim = 32
    n_channels = [128, 128, 128, 128]   # small stand-in for default [256]*4

    params = init_mlp_encoder(k_params, in_channels, latent_dim, n_channels)
    x = jax.random.normal(k_x, (B, in_channels), jnp.float32)

    mu, log_var = mlp_encoder_forward(params, x, latent_dim=latent_dim)
    jax.block_until_ready((mu, log_var))

    assert mu.shape == (B, latent_dim) and log_var.shape == (B, latent_dim)
    assert jnp.all(jnp.isfinite(mu)) and jnp.all(jnp.isfinite(log_var))
    print("KERNEL_OK")
</pallas_src>

<mosaic_0001>
module attributes {stable_mosaic.version = 11 : i64} {
  func.func @_fused_encoder_kernel_stacked(%arg0: memref<8x64xf32, #tpu.memory_space<vmem>>, %arg1: memref<64x128xbf16, #tpu.memory_space<vmem>>, %arg2: memref<3x128x128xbf16, #tpu.memory_space<vmem>>, %arg3: memref<8x128xf32, #tpu.memory_space<vmem>>, %arg4: memref<128x128xbf16, #tpu.memory_space<vmem>>, %arg5: memref<1x128xf32, #tpu.memory_space<vmem>>, %arg6: memref<8x128xf32, #tpu.memory_space<vmem>>) attributes {dimension_semantics = [], scalar_prefetch = 0 : i64, scratch_operands = 0 : i64, tpu.core_type = #tpu.core_type<tc>} {
    %c0 = arith.constant 0 : index
    %c0_0 = arith.constant 0 : index
    %0 = vector.load %arg0[%c0, %c0_0] : memref<8x64xf32, #tpu.memory_space<vmem>>, vector<8x64xf32>
    %c0_1 = arith.constant 0 : index
    %c0_2 = arith.constant 0 : index
    %1 = vector.load %arg3[%c0_1, %c0_2] : memref<8x128xf32, #tpu.memory_space<vmem>>, vector<8x128xf32>
    %c0_3 = arith.constant 0 : index
    %c0_4 = arith.constant 0 : index
    %2 = vector.load %arg1[%c0_3, %c0_4] : memref<64x128xbf16, #tpu.memory_space<vmem>>, vector<64x128xbf16>
    %3 = arith.truncf %0 : vector<8x64xf32> to vector<8x64xbf16>
    %cst = arith.constant dense<0.000000e+00> : vector<8x128xf32>
    %4 = tpu.matmul %3, %2, %cst {dimension_numbers = #tpu.dot_dimension_numbers<[1], [0], [0], [1], [0, 0, 1, 1], [], []>} : vector<8x64xbf16>, vector<64x128xbf16>, vector<8x128xf32> -> vector<8x128xf32>
    %5 = vector.extract_strided_slice %1 {offsets = [0, 0], sizes = [1, 128], strides = [1, 1]} : vector<8x128xf32> to vector<1x128xf32>
    %6 = vector.extract_strided_slice %1 {offsets = [1, 0], sizes = [1, 128], strides = [1, 1]} : vector<8x128xf32> to vector<1x128xf32>
    %cst_5 = arith.constant dense<0.000000e+00> : vector<128xf32>
    %7 = vector.multi_reduction <add>, %4, %cst_5 [0] : vector<8x128xf32> to vector<128xf32>
    %8 = vector.shape_cast %7 : vector<128xf32> to vector<1x128xf32>
    %cst_6 = arith.constant 1.250000e-01 : f32
    %9 = vector.broadcast %cst_6 : f32 to vector<1x128xf32>
    %10 = arith.mulf %8, %9 : vector<1x128xf32>
    %11 = arith.mulf %4, %4 : vector<8x128xf32>
    %cst_7 = arith.constant dense<0.000000e+00> : vector<128xf32>
    %12 = vector.multi_reduction <add>, %11, %cst_7 [0] : vector<8x128xf32> to vector<128xf32>
    %13 = vector.shape_cast %12 : vector<128xf32> to vector<1x128xf32>
    %cst_8 = arith.constant 1.250000e-01 : f32
    %14 = vector.broadcast %cst_8 : f32 to vector<1x128xf32>
    %15 = arith.mulf %13, %14 : vector<1x128xf32>
    %16 = arith.mulf %10, %10 : vector<1x128xf32>
    %17 = arith.subf %15, %16 : vector<1x128xf32>
    %cst_9 = arith.constant 0.000000e+00 : f32
    %18 = vector.broadcast %cst_9 : f32 to vector<1x128xf32>
    %19 = arith.maximumf %17, %18 : vector<1x128xf32>
    %cst_10 = arith.constant 9.99999974E-6 : f32
    %20 = vector.broadcast %cst_10 : f32 to vector<1x128xf32>
    %21 = arith.addf %19, %20 : vector<1x128xf32>
    %22 = math.rsqrt %21 : vector<1x128xf32>
    %23 = arith.mulf %5, %22 : vector<1x128xf32>
    %24 = arith.mulf %10, %23 : vector<1x128xf32>
    %25 = arith.subf %6, %24 : vector<1x128xf32>
    %26 = vector.broadcast %23 : vector<1x128xf32> to vector<8x128xf32>
    %27 = arith.mulf %4, %26 : vector<8x128xf32>
    %28 = vector.broadcast %25 : vector<1x128xf32> to vector<8x128xf32>
    %29 = arith.addf %27, %28 : vector<8x128xf32>
    %cst_11 = arith.constant 0.000000e+00 : f32
    %30 = vector.broadcast %cst_11 : f32 to vector<8x128xf32>
    %31 = arith.maximumf %29, %30 : vector<8x128xf32>
    %c0_12 = arith.constant 0 : index
    %c0_13 = arith.constant 0 : index
    %c0_14 = arith.constant 0 : index
    %32 = vector.load %arg2[%c0_12, %c0_13, %c0_14] : memref<3x128x128xbf16, #tpu.memory_space<vmem>>, vector<1x128x128xbf16>
    %33 = vector.shape_cast %32 : vector<1x128x128xbf16> to vector<128x128xbf16>
    %34 = arith.truncf %31 : vector<8x128xf32> to vector<8x128xbf16>
    %cst_15 = arith.constant dense<0.000000e+00> : vector<8x128xf32>
    %35 = tpu.matmul %34, %33, %cst_15 {dimension_numbers = #tpu.dot_dimension_numbers<[1], [0], [0], [1], [0, 0, 1, 1], [], []>} : vector<8x128xbf16>, vector<128x128xbf16>, vector<8x128xf32> -> vector<8x128xf32>
    %36 = vector.extract_strided_slice %1 {offsets = [2, 0], sizes = [1, 128], strides = [1, 1]} : vector<8x128xf32> to vector<1x128xf32>
    %37 = vector.extract_strided_slice %1 {offsets = [3, 0], sizes = [1, 128], strides = [1, 1]} : vector<8x128xf32> to vector<1x128xf32>
    %cst_16 = arith.constant dense<0.000000e+00> : vector<128xf32>
    %38 = vector.multi_reduction <add>, %35, %cst_16 [0] : vector<8x128xf32> to vector<128xf32>
    %39 = vector.shape_cast %38 : vector<128xf32> to vector<1x128xf32>
    %cst_17 = arith.constant 1.250000e-01 : f32
    %40 = vector.broadcast %cst_17 : f32 to vector<1x128xf32>
    %41 = arith.mulf %39, %40 : vector<1x128xf32>
    %42 = arith.mulf %35, %35 : vector<8x128xf32>
    %cst_18 = arith.constant dense<0.000000e+00> : vector<128xf32>
    %43 = vector.multi_reduction <add>, %42, %cst_18 [0] : vector<8x128xf32> to vector<128xf32>
    %44 = vector.shape_cast %43 : vector<128xf32> to vector<1x128xf32>
    %cst_19 = arith.constant 1.250000e-01 : f32
    %45 = vector.broadcast %cst_19 : f32 to vector<1x128xf32>
    %46 = arith.mulf %44, %45 : vector<1x128xf32>
    %47 = arith.mulf %41, %41 : vector<1x128xf32>
    %48 = arith.subf %46, %47 : vector<1x128xf32>
    %cst_20 = arith.constant 0.000000e+00 : f32
    %49 = vector.broadcast %cst_20 : f32 to vector<1x128xf32>
    %50 = arith.maximumf %48, %49 : vector<1x128xf32>
    %cst_21 = arith.constant 9.99999974E-6 : f32
    %51 = vector.broadcast %cst_21 : f32 to vector<1x128xf32>
    %52 = arith.addf %50, %51 : vector<1x128xf32>
    %53 = math.rsqrt %52 : vector<1x128xf32>
    %54 = arith.mulf %36, %53 : vector<1x128xf32>
    %55 = arith.mulf %41, %54 : vector<1x128xf32>
    %56 = arith.subf %37, %55 : vector<1x128xf32>
    %57 = vector.broadcast %54 : vector<1x128xf32> to vector<8x128xf32>
    %58 = arith.mulf %35, %57 : vector<8x128xf32>
    %59 = vector.broadcast %56 : vector<1x128xf32> to vector<8x128xf32>
    %60 = arith.addf %58, %59 : vector<8x128xf32>
    %cst_22 = arith.constant 0.000000e+00 : f32
    %61 = vector.broadcast %cst_22 : f32 to vector<8x128xf32>
    %62 = arith.maximumf %60, %61 : vector<8x128xf32>
    %c1 = arith.constant 1 : index
    %c0_23 = arith.constant 0 : index
    %c0_24 = arith.constant 0 : index
    %63 = vector.load %arg2[%c1, %c0_23, %c0_24] : memref<3x128x128xbf16, #tpu.memory_space<vmem>>, vector<1x128x128xbf16>
    %64 = vector.shape_cast %63 : vector<1x128x128xbf16> to vector<128x128xbf16>
    %65 = arith.truncf %62 : vector<8x128xf32> to vector<8x128xbf16>
    %cst_25 = arith.constant dense<0.000000e+00> : vector<8x128xf32>
    %66 = tpu.matmul %65, %64, %cst_25 {dimension_numbers = #tpu.dot_dimension_numbers<[1], [0], [0], [1], [0, 0, 1, 1], [], []>} : vector<8x128xbf16>, vector<128x128xbf16>, vector<8x128xf32> -> vector<8x128xf32>
    %67 = vector.extract_strided_slice %1 {offsets = [4, 0], sizes = [1, 128], strides = [1, 1]} : vector<8x128xf32> to vector<1x128xf32>
    %68 = vector.extract_strided_slice %1 {offsets = [5, 0], sizes = [1, 128], strides = [1, 1]} : vector<8x128xf32> to vector<1x128xf32>
    %cst_26 = arith.constant dense<0.000000e+00> : vector<128xf32>
    %69 = vector.multi_reduction <add>, %66, %cst_26 [0] : vector<8x128xf32> to vector<128xf32>
    %70 = vector.shape_cast %69 : vector<128xf32> to vector<1x128xf32>
    %cst_27 = arith.constant 1.250000e-01 : f32
    %71 = vector.broadcast %cst_27 : f32 to vector<1x128xf32>
    %72 = arith.mulf %70, %71 : vector<1x128xf32>
    %73 = arith.mulf %66, %66 : vector<8x128xf32>
    %cst_28 = arith.constant dense<0.000000e+00> : vector<128xf32>
    %74 = vector.multi_reduction <add>, %73, %cst_28 [0] : vector<8x128xf32> to vector<128xf32>
    %75 = vector.shape_cast %74 : vector<128xf32> to vector<1x128xf32>
    %cst_29 = arith.constant 1.250000e-01 : f32
    %76 = vector.broadcast %cst_29 : f32 to vector<1x128xf32>
    %77 = arith.mulf %75, %76 : vector<1x128xf32>
    %78 = arith.mulf %72, %72 : vector<1x128xf32>
    %79 = arith.subf %77, %78 : vector<1x128xf32>
    %cst_30 = arith.constant 0.000000e+00 : f32
    %80 = vector.broadcast %cst_30 : f32 to vector<1x128xf32>
    %81 = arith.maximumf %79, %80 : vector<1x128xf32>
    %cst_31 = arith.constant 9.99999974E-6 : f32
    %82 = vector.broadcast %cst_31 : f32 to vector<1x128xf32>
    %83 = arith.addf %81, %82 : vector<1x128xf32>
    %84 = math.rsqrt %83 : vector<1x128xf32>
    %85 = arith.mulf %67, %84 : vector<1x128xf32>
    %86 = arith.mulf %72, %85 : vector<1x128xf32>
    %87 = arith.subf %68, %86 : vector<1x128xf32>
    %88 = vector.broadcast %85 : vector<1x128xf32> to vector<8x128xf32>
    %89 = arith.mulf %66, %88 : vector<8x128xf32>
    %90 = vector.broadcast %87 : vector<1x128xf32> to vector<8x128xf32>
    %91 = arith.addf %89, %90 : vector<8x128xf32>
    %cst_32 = arith.constant 0.000000e+00 : f32
    %92 = vector.broadcast %cst_32 : f32 to vector<8x128xf32>
    %93 = arith.maximumf %91, %92 : vector<8x128xf32>
    %c2 = arith.constant 2 : index
    %c0_33 = arith.constant 0 : index
    %c0_34 = arith.constant 0 : index
    %94 = vector.load %arg2[%c2, %c0_33, %c0_34] : memref<3x128x128xbf16, #tpu.memory_space<vmem>>, vector<1x128x128xbf16>
    %95 = vector.shape_cast %94 : vector<1x128x128xbf16> to vector<128x128xbf16>
    %96 = arith.truncf %93 : vector<8x128xf32> to vector<8x128xbf16>
    %cst_35 = arith.constant dense<0.000000e+00> : vector<8x128xf32>
    %97 = tpu.matmul %96, %95, %cst_35 {dimension_numbers = #tpu.dot_dimension_numbers<[1], [0], [0], [1], [0, 0, 1, 1], [], []>} : vector<8x128xbf16>, vector<128x128xbf16>, vector<8x128xf32> -> vector<8x128xf32>
    %98 = vector.extract_strided_slice %1 {offsets = [6, 0], sizes = [1, 128], strides = [1, 1]} : vector<8x128xf32> to vector<1x128xf32>
    %99 = vector.extract_strided_slice %1 {offsets = [7, 0], sizes = [1, 128], strides = [1, 1]} : vector<8x128xf32> to vector<1x128xf32>
    %cst_36 = arith.constant dense<0.000000e+00> : vector<128xf32>
    %100 = vector.multi_reduction <add>, %97, %cst_36 [0] : vector<8x128xf32> to vector<128xf32>
    %101 = vector.shape_cast %100 : vector<128xf32> to vector<1x128xf32>
    %cst_37 = arith.constant 1.250000e-01 : f32
    %102 = vector.broadcast %cst_37 : f32 to vector<1x128xf32>
    %103 = arith.mulf %101, %102 : vector<1x128xf32>
    %104 = arith.mulf %97, %97 : vector<8x128xf32>
    %cst_38 = arith.constant dense<0.000000e+00> : vector<128xf32>
    %105 = vector.multi_reduction <add>, %104, %cst_38 [0] : vector<8x128xf32> to vector<128xf32>
    %106 = vector.shape_cast %105 : vector<128xf32> to vector<1x128xf32>
    %cst_39 = arith.constant 1.250000e-01 : f32
    %107 = vector.broadcast %cst_39 : f32 to vector<1x128xf32>
    %108 = arith.mulf %106, %107 : vector<1x128xf32>
    %109 = arith.mulf %103, %103 : vector<1x128xf32>
    %110 = arith.subf %108, %109 : vector<1x128xf32>
    %cst_40 = arith.constant 0.000000e+00 : f32
    %111 = vector.broadcast %cst_40 : f32 to vector<1x128xf32>
    %112 = arith.maximumf %110, %111 : vector<1x128xf32>
    %cst_41 = arith.constant 9.99999974E-6 : f32
    %113 = vector.broadcast %cst_41 : f32 to vector<1x128xf32>
    %114 = arith.addf %112, %113 : vector<1x128xf32>
    %115 = math.rsqrt %114 : vector<1x128xf32>
    %116 = arith.mulf %98, %115 : vector<1x128xf32>
    %117 = arith.mulf %103, %116 : vector<1x128xf32>
    %118 = arith.subf %99, %117 : vector<1x128xf32>
    %119 = vector.broadcast %116 : vector<1x128xf32> to vector<8x128xf32>
    %120 = arith.mulf %97, %119 : vector<8x128xf32>
    %121 = vector.broadcast %118 : vector<1x128xf32> to vector<8x128xf32>
    %122 = arith.addf %120, %121 : vector<8x128xf32>
    %cst_42 = arith.constant 0.000000e+00 : f32
    %123 = vector.broadcast %cst_42 : f32 to vector<8x128xf32>
    %124 = arith.maximumf %122, %123 : vector<8x128xf32>
    %125 = arith.truncf %124 : vector<8x128xf32> to vector<8x128xbf16>
    %c0_43 = arith.constant 0 : index
    %c0_44 = arith.constant 0 : index
    %126 = vector.load %arg4[%c0_43, %c0_44] : memref<128x128xbf16, #tpu.memory_space<vmem>>, vector<128x128xbf16>
    %cst_45 = arith.constant dense<0.000000e+00> : vector<8x128xf32>
    %127 = tpu.matmul %125, %126, %cst_45 {dimension_numbers = #tpu.dot_dimension_numbers<[1], [0], [0], [1], [0, 0, 1, 1], [], []>} : vector<8x128xbf16>, vector<128x128xbf16>, vector<8x128xf32> -> vector<8x128xf32>
    %c0_46 = arith.constant 0 : index
    %c0_47 = arith.constant 0 : index
    %128 = vector.load %arg5[%c0_46, %c0_47] : memref<1x128xf32, #tpu.memory_space<vmem>>, vector<1x128xf32>
    %129 = vector.broadcast %128 : vector<1x128xf32> to vector<8x128xf32>
    %130 = arith.addf %127, %129 : vector<8x128xf32>
    %c0_48 = arith.constant 0 : index
    %c0_49 = arith.constant 0 : index
    %131 = vector.load %arg6[%c0_48, %c0_49] : memref<8x128xf32, #tpu.memory_space<vmem>>, vector<8x128xf32>
    tpu.vector_store %arg6[%c0_48, %c0_49], %130 {strides = array<i32>} : memref<8x128xf32, #tpu.memory_space<vmem>>, vector<8x128xf32>,
    return
  }
}

</mosaic_0001>

<llo_original>
// kernel: mlp_encoder_forward.1
$region0: #{mlp_encoder_forward.1}
  #allocation0 [shape = 'u32[]', space=smem, size = 0x4, offset = 0x4, fixed_abs, tag = 'smem constant byte address 0x4 - core index']
  #allocation1 [shape = 'u32[144,128]{1,0:T(1,128)}', space=vmem, size = 0x12000, scoped, tag = 'internal scratch']
  %s0 = inlined_call_operand.vmem [shape: f32[8,64], index: 0, kind: input, shape index: {}]
  %s1 = inlined_call_operand.hbm [shape: bf16[64,128], index: 1, kind: input, shape index: {}]
  %s2 = inlined_call_operand.hbm [shape: bf16[3,128,128], index: 2, kind: input, shape index: {}]
  %s3 = inlined_call_operand.hbm [shape: f32[8,128], index: 3, kind: input, shape index: {}]
  %s4 = inlined_call_operand.hbm [shape: bf16[128,128], index: 4, kind: input, shape index: {}]
  %s5 = inlined_call_operand.vmem [shape: f32[1,128], index: 5, kind: input, shape index: {}]
  %s6 = inlined_call_operand.vmem [shape: f32[8,128], index: 6, kind: output, shape index: {}]
  %s7 = sld [smem:[#allocation0]]
  $region50: #{mlp_encoder_forward.1} parent=0
    _
  %s9 = ssub.s32 1, %s7
  %s10 = scalar_select 0, %s9, %s7
  $region1: #{mlp_encoder_forward.1} parent=0
    #allocation2 [shape = 'u8[16384]{0}', space=vmem, size = 0x4000, scoped, tag = 'input window, operand 1, single buffered']
    #allocation3 [shape = 's32[1]{0}', space=sflag, size = 0x4, scoped, tag = 'scoped memory for mlp_encoder_forward.1']
    #allocation4 [shape = 'u8[98304]{0}', space=vmem, size = 0x18000, scoped, tag = 'input window, operand 2, single buffered']
    #allocation5 [shape = 's32[1]{0}', space=sflag, size = 0x4, scoped, tag = 'scoped memory for mlp_encoder_forward.1']
    #allocation6 [shape = 'u8[4096]{0}', space=vmem, size = 0x1000, scoped, tag = 'input window, operand 3, single buffered']
    #allocation7 [shape = 'u8[32768]{0}', space=vmem, size = 0x8000, scoped, tag = 'input window, operand 4, single buffered']
    #allocation8 [shape = 's32[1]{0}', space=sflag, size = 0x4, scoped, tag = 'scoped memory for mlp_encoder_forward.1']
    %11 = vsyncpa [#allocation3], 0
    %12 = vsyncpa [#allocation5], 0
    %13 = vsyncpa [#allocation8], 0
    // Predicated region
    $region2: #{mlp_encoder_forward.1} parent=1 // pred_check
      _
    $region3: #{mlp_encoder_forward.1} parent=1 // pred_check_branch
      %15 = sbr.rel (0) target = $region5
    $region4: #{mlp_encoder_forward.1} parent=1 // pred_region
      _
    $region5: #{mlp_encoder_forward.1} parent=1 // pred_fallthru
      _
    // Predicated region
    $region6: #{mlp_encoder_forward.1} parent=1 // pred_check
      _
    $region7: #{mlp_encoder_forward.1} parent=1 // pred_check_branch
      %17 = sbr.rel (0) target = $region9
    $region8: #{mlp_encoder_forward.1} parent=1 // pred_region
      %s19 = ssub.s32 512, 512
      %20 = vsyncadd [#allocation3], %s19
      %s21 = sshll.u32 [#allocation2], 4
      %s22 = int_to_ptr.vmem [resolvable:$true] %s21
      %27 = dma.hbm_to_vmem [thread:$0]  %s1, 512, %s22, [#allocation3], 64, 64, 4
    $region9: #{mlp_encoder_forward.1} parent=1 // pred_fallthru
      _
    // Predicated region
    $region10: #{mlp_encoder_forward.1} parent=1 // pred_check
      _
    $region11: #{mlp_encoder_forward.1} parent=1 // pred_check_branch
      %29 = sbr.rel (0) target = $region13
    $region12: #{mlp_encoder_forward.1} parent=1 // pred_region
      %s31 = ssub.s32 3072, 3072
      %32 = vsyncadd [#allocation5], %s31
      %s33 = sshll.u32 [#allocation4], 4
      %s34 = int_to_ptr.vmem [resolvable:$true] %s33
      %39 = dma.hbm_to_vmem [thread:$0]  %s2, 3072, %s34, [#allocation5], 64, 64, 4
    $region13: #{mlp_encoder_forward.1} parent=1 // pred_fallthru
      _
    // Predicated region
    $region14: #{mlp_encoder_forward.1} parent=1 // pred_check
      _
    $region15: #{mlp_encoder_forward.1} parent=1 // pred_check_branch
      %41 = sbr.rel (0) target = $region17
    $region16: #{mlp_encoder_forward.1} parent=1 // pred_region
      %s43 = ssub.s32 128, 128
      %44 = vsyncadd [#allocation5], %s43
      %s46 = sshll.u32 [#allocation6], 4
      %s47 = int_to_ptr.vmem [resolvable:$true] %s46
      %49 = dma.hbm_to_vmem [thread:$0]  %s3, 128, %s47, [#allocation5]
    $region17: #{mlp_encoder_forward.1} parent=1 // pred_fallthru
      _
    // Predicated region
    $region18: #{mlp_encoder_forward.1} parent=1 // pred_check
      _
    $region19: #{mlp_encoder_forward.1} parent=1 // pred_check_branch
      %51 = sbr.rel (0) target = $region21
    $region20: #{mlp_encoder_forward.1} parent=1 // pred_region
      %s53 = ssub.s32 1024, 1024
      %54 = vsyncadd [#allocation8], %s53
      %s55 = sshll.u32 [#allocation7], 4
      %s56 = int_to_ptr.vmem [resolvable:$true] %s55
      %61 = dma.hbm_to_vmem [thread:$0]  %s4, 1024, %s56, [#allocation8], 64, 64, 4
    $region21: #{mlp_encoder_forward.1} parent=1 // pred_fallthru
      _
    // Predicated region
    $region22: #{mlp_encoder_forward.1} parent=1 // pred_check
      _
    $region23: #{mlp_encoder_forward.1} parent=1 // pred_check_branch
      %63 = sbr.rel (0) target = $region25
    $region24: #{mlp_encoder_forward.1} parent=1 // pred_region
      _
    $region25: #{mlp_encoder_forward.1} parent=1 // pred_fallthru
      _
    // Predicated region
    $region26: #{mlp_encoder_forward.1} parent=1 // pred_check
      _
    $region27: #{mlp_encoder_forward.1} parent=1 // pred_check_branch
      %65 = sbr.rel (0) target = $region29
    $region28: #{mlp_encoder_forward.1} parent=1 // pred_region
      %66 = dma.done [#allocation3], 512
    $region29: #{mlp_encoder_forward.1} parent=1 // pred_fallthru
      _
    // Predicated region
    $region30: #{mlp_encoder_forward.1} parent=1 // pred_check
      _
    $region31: #{mlp_encoder_forward.1} parent=1 // pred_check_branch
      %68 = sbr.rel (0) target = $region33
    $region32: #{mlp_encoder_forward.1} parent=1 // pred_region
      %69 = dma.done [#allocation5], 3072
    $region33: #{mlp_encoder_forward.1} parent=1 // pred_fallthru
      _
    // Predicated region
    $region34: #{mlp_encoder_forward.1} parent=1 // pred_check
      _
    $region35: #{mlp_encoder_forward.1} parent=1 // pred_check_branch
      %71 = sbr.rel (0) target = $region37
    $region36: #{mlp_encoder_forward.1} parent=1 // pred_region
      %72 = dma.done [#allocation5], 128
    $region37: #{mlp_encoder_forward.1} parent=1 // pred_fallthru
      _
    // Predicated region
    $region38: #{mlp_encoder_forward.1} parent=1 // pred_check
      _
    $region39: #{mlp_encoder_forward.1} parent=1 // pred_check_branch
      %74 = sbr.rel (0) target = $region41
    $region40: #{mlp_encoder_forward.1} parent=1 // pred_region
      %75 = dma.done [#allocation8], 1024
    $region41: #{mlp_encoder_forward.1} parent=1 // pred_fallthru
      _
    %v77 = vld [vmem:[%s0] sm:$0xff]
    %v78 = vld [vmem:[#allocation6] sm:$0xff]
    %v79 = vld [vmem:[#allocation2] sm:$0xf]
    %v80 = vld [vmem:[#allocation2 + $0x4] sm:$0xf]
    %v81 = vld [vmem:[#allocation2 + $0x8] sm:$0xf]
    %v82 = vld [vmem:[#allocation2 + $0xc] sm:$0xf]
    %v83 = vld [vmem:[#allocation2 + $0x10] sm:$0xf]
    %v84 = vld [vmem:[#allocation2 + $0x14] sm:$0xf]
    %v85 = vld [vmem:[#allocation2 + $0x18] sm:$0xf]
    %v86 = vld [vmem:[#allocation2 + $0x1c] sm:$0xf]
    %v87 = vpack.c.bf16 %v77, %v77
    %v96 = vunpack.c.l.b16 %v79
    %v97 = vunpack.c.l.b16 %v80
    %v98 = vunpack.c.l.b16 %v81
    %v99 = vunpack.c.l.b16 %v82
    %v100 = vunpack.c.l.b16 %v83
    %v101 = vunpack.c.l.b16 %v84
    %v102 = vunpack.c.l.b16 %v85
    %v103 = vunpack.c.l.b16 %v86
    %v104 = vpack.c.b16 %v97, %v96
    %v105 = vpack.c.b16 %v99, %v98
    %v106 = vpack.c.b16 %v101, %v100
    %v107 = vpack.c.b16 %v103, %v102
    %vm112 = vcmask 523264
    %v114 = vsel %vm112, %v87, 0
    %116 = vmatprep.subr.bf16.mxu0 0
    %117 = vmatpush1.bf16.msra.mxu0 %v104
    %118 = vmatprep.subr.bf16.mxu0 0
    %119 = vmatpush1.bf16.msra.mxu0 %v105
    %120 = vmatprep.subr.bf16.mxu0 0
    %121 = vmatpush1.bf16.msra.mxu0 %v106
    %122 = vmatprep.subr.bf16.mxu0 0
    %123 = vmatpush1.bf16.msra.mxu0 %v107
    %124 = vmatprep.subr.bf16.mxu0 0
    %125 = vmatpush1.bf16.msra.mxu0 0
    %126 = vmatprep.subr.bf16.mxu0 0
    %127 = vmatpush1.bf16.msra.mxu0 0
    %128 = vmatprep.subr.bf16.mxu0 0
    %129 = vmatpush1.bf16.msra.mxu0 0
    %130 = vmatprep.subr.bf16.mxu0 0
    %131 = vmatpush1.bf16.msra.mxu0 0
    %132 = vmatprep.subr.bf16.mxu0 0
    %133 = vmatpush1.bf16.msra.mxu0 0
    %134 = vmatprep.subr.bf16.mxu0 0
    %135 = vmatpush1.bf16.msra.mxu0 0
    %136 = vmatprep.subr.bf16.mxu0 0
    %137 = vmatpush1.bf16.msra.mxu0 0
    %138 = vmatprep.subr.bf16.mxu0 0
    %139 = vmatpush1.bf16.msra.mxu0 0
    %140 = vmatprep.subr.bf16.mxu0 0
    %141 = vmatpush1.bf16.msra.mxu0 0
    %142 = vmatprep.subr.bf16.mxu0 0
    %143 = vmatpush1.bf16.msra.mxu0 0
    %144 = vmatprep.subr.bf16.mxu0 0
    %145 = vmatpush1.bf16.msra.mxu0 0
    %146 = vmatprep.subr.bf16.mxu0 0
    %147 = vmatpush1.bf16.msra.mxu0 0
    %148 = vmatprep.mubr.bf16.mxu0 0
    %149 = vmatmul.mubr.bf16.gmra.mrb[0].mxu0 %v114
    %v150 = vpop.f32.mrb[0].mxu0
    %v151 = vadd.f32 0.0, %v150
    %v152 = vpop.f32.mrb[0].mxu0
    %v153 = vpop.f32.mrb[0].mxu0
    %v154 = vpop.f32.mrb[0].mxu0
    %155 = vdwg.mxu0
    %v156 = vrot.slane %v151, 4
    %v157 = vadd.f32 %v151, %v156
    %v158 = vrot.slane %v157, 2
    %v159 = vadd.f32 %v157, %v158
    %v160 = vrot.slane %v159, 1
    %v161 = vadd.f32 %v159, %v160
    %v162 = vmul.f32 %v161, 0.125
    %v163 = vmul.f32 %v151, %v151
    %v164 = vrot.slane %v163, 4
    %v165 = vadd.f32 %v163, %v164
    %v166 = vrot.slane %v165, 2
    %v167 = vadd.f32 %v165, %v166
    %v168 = vrot.slane %v167, 1
    %v169 = vadd.f32 %v167, %v168
    %v170 = vmul.f32 %v169, 0.125
    %v171 = vmul.f32 %v162, %v162
    %v172 = vsub.f32 %v170, %v171
    %v173 = vmax.f32 %v172, 0.0
    %v174 = vadd.f32 %v173, 1e-05
    %v175 = vrsqrt.pop %v174
    %v176 = vmul.f32 %v78, %v175
    %v177 = vmul.f32 %v162, %v176
    %v179 = vrot.slane %v177, 7
    %v181 = vsub.f32 %v78, %v179
    %v182 = vlaneseq
    %v183 = vshrl.u32 %v182, 7
    %v184 = vsub.s32 0, %v183
    %v185 = vrot.slane %v176, %v184
    %v186 = vmul.f32 %v151, %v185
    %v187 = vlaneseq
    %v188 = vshrl.u32 %v187, 7
    %v189 = vsub.s32 1, %v188
    %v190 = vrot.slane %v181, %v189
    %v191 = vadd.f32 %v186, %v190
    %v192 = vmax.f32 %v191, 0.0
    %v193 = vld [vmem:[#allocation4] sm:$0xf]
    %v194 = vld [vmem:[#allocation4 + $0x4] sm:$0xf]
    %v195 = vld [vmem:[#allocation4 + $0x8] sm:$0xf]
    %v196 = vld [vmem:[#allocation4 + $0xc] sm:$0xf]
    %v197 = vld [vmem:[#allocation4 + $0x10] sm:$0xf]
    %v198 = vld [vmem:[#allocation4 + $0x14] sm:$0xf]
    %v199 = vld [vmem:[#allocation4 + $0x18] sm:$0xf]
    %v200 = vld [vmem:[#allocation4 + $0x1c] sm:$0xf]
    %v201 = vld [vmem:[#allocation4 + $0x20] sm:$0xf]
    %v202 = vld [vmem:[#allocation4 + $0x24] sm:$0xf]
    %v203 = vld [vmem:[#allocation4 + $0x28] sm:$0xf]
    %v204 = vld [vmem:[#allocation4 + $0x2c] sm:$0xf]
    %v205 = vld [vmem:[#allocation4 + $0x30] sm:$0xf]
    %v206 = vld [vmem:[#allocation4 + $0x34] sm:$0xf]
    %v207 = vld [vmem:[#allocation4 + $0x38] sm:$0xf]
    %v208 = vld [vmem:[#allocation4 + $0x3c] sm:$0xf]
    %v209 = vpack.c.bf16 %v192, %v192
    %v226 = vunpack.c.l.b16 %v193
    %v227 = vunpack.c.l.b16 %v194
    %v228 = vunpack.c.l.b16 %v195
    %v229 = vunpack.c.l.b16 %v196
    %v230 = vunpack.c.l.b16 %v197
    %v231 = vunpack.c.l.b16 %v198
    %v232 = vunpack.c.l.b16 %v199
    %v233 = vunpack.c.l.b16 %v200
    %v234 = vunpack.c.l.b16 %v201
    %v235 = vunpack.c.l.b16 %v202
    %v236 = vunpack.c.l.b16 %v203
    %v237 = vunpack.c.l.b16 %v204
    %v238 = vunpack.c.l.b16 %v205
    %v239 = vunpack.c.l.b16 %v206
    %v240 = vunpack.c.l.b16 %v207
    %v241 = vunpack.c.l.b16 %v208
    %v242 = vpack.c.b16 %v227, %v226
    %v243 = vpack.c.b16 %v229, %v228
    %v244 = vpack.c.b16 %v231, %v230
    %v245 = vpack.c.b16 %v233, %v232
    %v246 = vpack.c.b16 %v235, %v234
    %v247 = vpack.c.b16 %v237, %v236
    %v248 = vpack.c.b16 %v239, %v238
    %v249 = vpack.c.b16 %v241, %v240
    %258 = vmatprep.subr.bf16.mxu0 0
    %259 = vmatpush1.bf16.msra.mxu0 %v242
    %260 = vmatprep.subr.bf16.mxu0 0
    %261 = vmatpush1.bf16.msra.mxu0 %v243
    %262 = vmatprep.subr.bf16.mxu0 0
    %263 = vmatpush1.bf16.msra.mxu0 %v244
    %264 = vmatprep.subr.bf16.mxu0 0
    %265 = vmatpush1.bf16.msra.mxu0 %v245
    %266 = vmatprep.subr.bf16.mxu0 0
    %267 = vmatpush1.bf16.msra.mxu0 %v246
    %268 = vmatprep.subr.bf16.mxu0 0
    %269 = vmatpush1.bf16.msra.mxu0 %v247
    %270 = vmatprep.subr.bf16.mxu0 0
    %271 = vmatpush1.bf16.msra.mxu0 %v248
    %272 = vmatprep.subr.bf16.mxu0 0
    %273 = vmatpush1.bf16.msra.mxu0 %v249
    %274 = vmatprep.subr.bf16.mxu0 0
    %275 = vmatpush1.bf16.msra.mxu0 0
    %276 = vmatprep.subr.bf16.mxu0 0
    %277 = vmatpush1.bf16.msra.mxu0 0
    %278 = vmatprep.subr.bf16.mxu0 0
    %279 = vmatpush1.bf16.msra.mxu0 0
    %280 = vmatprep.subr.bf16.mxu0 0
    %281 = vmatpush1.bf16.msra.mxu0 0
    %282 = vmatprep.subr.bf16.mxu0 0
    %283 = vmatpush1.bf16.msra.mxu0 0
    %284 = vmatprep.subr.bf16.mxu0 0
    %285 = vmatpush1.bf16.msra.mxu0 0
    %286 = vmatprep.subr.bf16.mxu0 0
    %287 = vmatpush1.bf16.msra.mxu0 0
    %288 = vmatprep.subr.bf16.mxu0 0
    %289 = vmatpush1.bf16.msra.mxu0 0
    %290 = vmatprep.mubr.bf16.mxu0 0
    %291 = vmatmul.mubr.bf16.gmra.mrb[0].mxu0 %v209
    %v292 = vpop.f32.mrb[0].mxu0
    %v293 = vadd.f32 0.0, %v292
    %v294 = vpop.f32.mrb[0].mxu0
    %v295 = vpop.f32.mrb[0].mxu0
    %v296 = vpop.f32.mrb[0].mxu0
    %297 = vdwg.mxu0
    %v298 = vrot.slane %v293, 4
    %v299 = vadd.f32 %v293, %v298
    %v300 = vrot.slane %v299, 2
    %v301 = vadd.f32 %v299, %v300
    %v302 = vrot.slane %v301, 1
    %v303 = vadd.f32 %v301, %v302
    %v304 = vmul.f32 %v303, 0.125
    %v305 = vmul.f32 %v293, %v293
    %v306 = vrot.slane %v305, 4
    %v307 = vadd.f32 %v305, %v306
    %v308 = vrot.slane %v307, 2
    %v309 = vadd.f32 %v307, %v308
    %v310 = vrot.slane %v309, 1
    %v311 = vadd.f32 %v309, %v310
    %v312 = vmul.f32 %v311, 0.125
    %v313 = vmul.f32 %v304, %v304
    %v314 = vsub.f32 %v312, %v313
    %v315 = vmax.f32 %v314, 0.0
    %v316 = vadd.f32 %v315, 1e-05
    %v317 = vrsqrt.pop %v316
    %v318 = vmul.f32 %v78, %v317
    %v319 = vmul.f32 %v304, %v318
    %v321 = vrot.slane %v319, 7
    %v323 = vsub.f32 %v78, %v321
    %v324 = vlaneseq
    %v325 = vshrl.u32 %v324, 7
    %v326 = vsub.s32 2, %v325
    %v327 = vrot.slane %v318, %v326
    %v328 = vmul.f32 %v293, %v327
    %v329 = vlaneseq
    %v330 = vshrl.u32 %v329, 7
    %v331 = vsub.s32 3, %v330
    %v332 = vrot.slane %v323, %v331
    %v333 = vadd.f32 %v328, %v332
    %v334 = vmax.f32 %v333, 0.0
    %s335 = scalar_lea.vmem [#allocation4], 64
    %v336 = vld [vmem:[%s335] sm:$0xf]
    %v337 = vld [vmem:[%s335 + $0x4] sm:$0xf]
    %v338 = vld [vmem:[%s335 + $0x8] sm:$0xf]
    %v339 = vld [vmem:[%s335 + $0xc] sm:$0xf]
    %v340 = vld [vmem:[%s335 + $0x10] sm:$0xf]
    %v341 = vld [vmem:[%s335 + $0x14] sm:$0xf]
    %v342 = vld [vmem:[%s335 + $0x18] sm:$0xf]
    %v343 = vld [vmem:[%s335 + $0x1c] sm:$0xf]
    %v344 = vld [vmem:[%s335 + $0x20] sm:$0xf]
    %v345 = vld [vmem:[%s335 + $0x24] sm:$0xf]
    %v346 = vld [vmem:[%s335 + $0x28] sm:$0xf]
    %v347 = vld [vmem:[%s335 + $0x2c] sm:$0xf]
    %v348 = vld [vmem:[%s335 + $0x30] sm:$0xf]
    %v349 = vld [vmem:[%s335 + $0x34] sm:$0xf]
    %v350 = vld [vmem:[%s335 + $0x38] sm:$0xf]
    %v351 = vld [vmem:[%s335 + $0x3c] sm:$0xf]
    %v352 = vpack.c.bf16 %v334, %v334
    %v369 = vunpack.c.l.b16 %v336
    %v370 = vunpack.c.l.b16 %v337
    %v371 = vunpack.c.l.b16 %v338
    %v372 = vunpack.c.l.b16 %v339
    %v373 = vunpack.c.l.b16 %v340
    %v374 = vunpack.c.l.b16 %v341
    %v375 = vunpack.c.l.b16 %v342
    %v376 = vunpack.c.l.b16 %v343
    %v377 = vunpack.c.l.b16 %v344
    %v378 = vunpack.c.l.b16 %v345
    %v379 = vunpack.c.l.b16 %v346
    %v380 = vunpack.c.l.b16 %v347
    %v381 = vunpack.c.l.b16 %v348
    %v382 = vunpack.c.l.b16 %v349
    %v383 = vunpack.c.l.b16 %v350
    %v384 = vunpack.c.l.b16 %v351
    %v385 = vpack.c.b16 %v370, %v369
    %v386 = vpack.c.b16 %v372, %v371
    %v387 = vpack.c.b16 %v374, %v373
    %v388 = vpack.c.b16 %v376, %v375
    %v389 = vpack.c.b16 %v378, %v377
    %v390 = vpack.c.b16 %v380, %v379
    %v391 = vpack.c.b16 %v382, %v381
    %v392 = vpack.c.b16 %v384, %v383
    %401 = vmatprep.subr.bf16.mxu0 0
    %402 = vmatpush1.bf16.msra.mxu0 %v385
    %403 = vmatprep.subr.bf16.mxu0 0
    %404 = vmatpush1.bf16.msra.mxu0 %v386
    %405 = vmatprep.subr.bf16.mxu0 0
    %406 = vmatpush1.bf16.msra.mxu0 %v387
    %407 = vmatprep.subr.bf16.mxu0 0
    %408 = vmatpush1.bf16.msra.mxu0 %v388
    %409 = vmatprep.subr.bf16.mxu0 0
    %410 = vmatpush1.bf16.msra.mxu0 %v389
    %411 = vmatprep.subr.bf16.mxu0 0
    %412 = vmatpush1.bf16.msra.mxu0 %v390
    %413 = vmatprep.subr.bf16.mxu0 0
    %414 = vmatpush1.bf16.msra.mxu0 %v391
    %415 = vmatprep.subr.bf16.mxu0 0
    %416 = vmatpush1.bf16.msra.mxu0 %v392
    %417 = vmatprep.subr.bf16.mxu0 0
    %418 = vmatpush1.bf16.msra.mxu0 0
    %419 = vmatprep.subr.bf16.mxu0 0
    %420 = vmatpush1.bf16.msra.mxu0 0
    %421 = vmatprep.subr.bf16.mxu0 0
    %422 = vmatpush1.bf16.msra.mxu0 0
    %423 = vmatprep.subr.bf16.mxu0 0
    %424 = vmatpush1.bf16.msra.mxu0 0
    %425 = vmatprep.subr.bf16.mxu0 0
    %426 = vmatpush1.bf16.msra.mxu0 0
    %427 = vmatprep.subr.bf16.mxu0 0
    %428 = vmatpush1.bf16.msra.mxu0 0
    %429 = vmatprep.subr.bf16.mxu0 0
    %430 = vmatpush1.bf16.msra.mxu0 0
    %431 = vmatprep.subr.bf16.mxu0 0
    %432 = vmatpush1.bf16.msra.mxu0 0
    %433 = vmatprep.mubr.bf16.mxu0 0
    %434 = vmatmul.mubr.bf16.gmra.mrb[0].mxu0 %v352
    %v435 = vpop.f32.mrb[0].mxu0
    %v436 = vadd.f32 0.0, %v435
    %v437 = vpop.f32.mrb[0].mxu0
    %v438 = vpop.f32.mrb[0].mxu0
    %v439 = vpop.f32.mrb[0].mxu0
    %440 = vdwg.mxu0
    %v441 = vrot.slane %v436, 4
    %v442 = vadd.f32 %v436, %v441
    %v443 = vrot.slane %v442, 2
    %v444 = vadd.f32 %v442, %v443
    %v445 = vrot.slane %v444, 1
    %v446 = vadd.f32 %v444, %v445
    %v447 = vmul.f32 %v446, 0.125
    %v448 = vmul.f32 %v436, %v436
    %v449 = vrot.slane %v448, 4
    %v450 = vadd.f32 %v448, %v449
    %v451 = vrot.slane %v450, 2
    %v452 = vadd.f32 %v450, %v451
    %v453 = vrot.slane %v452, 1
    %v454 = vadd.f32 %v452, %v453
    %v455 = vmul.f32 %v454, 0.125
    %v456 = vmul.f32 %v447, %v447
    %v457 = vsub.f32 %v455, %v456
    %v458 = vmax.f32 %v457, 0.0
    %v459 = vadd.f32 %v458, 1e-05
    %v460 = vrsqrt.pop %v459
    %v461 = vmul.f32 %v78, %v460
    %v462 = vmul.f32 %v447, %v461
    %v464 = vrot.slane %v462, 7
    %v466 = vsub.f32 %v78, %v464
    %v467 = vlaneseq
    %v468 = vshrl.u32 %v467, 7
    %v469 = vsub.s32 4, %v468
    %v470 = vrot.slane %v461, %v469
    %v471 = vmul.f32 %v436, %v470
    %v472 = vlaneseq
    %v473 = vshrl.u32 %v472, 7
    %v474 = vsub.s32 5, %v473
    %v475 = vrot.slane %v466, %v474
    %v476 = vadd.f32 %v471, %v475
    %v477 = vmax.f32 %v476, 0.0
    %s478 = scalar_lea.vmem [#allocation4], 128
    %v479 = vld [vmem:[%s478] sm:$0xf]
    %v480 = vld [vmem:[%s478 + $0x4] sm:$0xf]
    %v481 = vld [vmem:[%s478 + $0x8] sm:$0xf]
    %v482 = vld [vmem:[%s478 + $0xc] sm:$0xf]
    %v483 = vld [vmem:[%s478 + $0x10] sm:$0xf]
    %v484 = vld [vmem:[%s478 + $0x14] sm:$0xf]
    %v485 = vld [vmem:[%s478 + $0x18] sm:$0xf]
    %v486 = vld [vmem:[%s478 + $0x1c] sm:$0xf]
    %v487 = vld [vmem:[%s478 + $0x20] sm:$0xf]
    %v488 = vld [vmem:[%s478 + $0x24] sm:$0xf]
    %v489 = vld [vmem:[%s478 + $0x28] sm:$0xf]
    %v490 = vld [vmem:[%s478 + $0x2c] sm:$0xf]
    %v491 = vld [vmem:[%s478 + $0x30] sm:$0xf]
    %v492 = vld [vmem:[%s478 + $0x34] sm:$0xf]
    %v493 = vld [vmem:[%s478 + $0x38] sm:$0xf]
    %v494 = vld [vmem:[%s478 + $0x3c] sm:$0xf]
    %v495 = vpack.c.bf16 %v477, %v477
    %v512 = vunpack.c.l.b16 %v479
    %v513 = vunpack.c.l.b16 %v480
    %v514 = vunpack.c.l.b16 %v481
    %v515 = vunpack.c.l.b16 %v482
    %v516 = vunpack.c.l.b16 %v483
    %v517 = vunpack.c.l.b16 %v484
    %v518 = vunpack.c.l.b16 %v485
    %v519 = vunpack.c.l.b16 %v486
    %v520 = vunpack.c.l.b16 %v487
    %v521 = vunpack.c.l.b16 %v488
    %v522 = vunpack.c.l.b16 %v489
    %v523 = vunpack.c.l.b16 %v490
    %v524 = vunpack.c.l.b16 %v491
    %v525 = vunpack.c.l.b16 %v492
    %v526 = vunpack.c.l.b16 %v493
    %v527 = vunpack.c.l.b16 %v494
    %v528 = vpack.c.b16 %v513, %v512
    %v529 = vpack.c.b16 %v515, %v514
    %v530 = vpack.c.b16 %v517, %v516
    %v531 = vpack.c.b16 %v519, %v518
    %v532 = vpack.c.b16 %v521, %v520
    %v533 = vpack.c.b16 %v523, %v522
    %v534 = vpack.c.b16 %v525, %v524
    %v535 = vpack.c.b16 %v527, %v526
    %544 = vmatprep.subr.bf16.mxu0 0
    %545 = vmatpush1.bf16.msra.mxu0 %v528
    %546 = vmatprep.subr.bf16.mxu0 0
    %547 = vmatpush1.bf16.msra.mxu0 %v529
    %548 = vmatprep.subr.bf16.mxu0 0
    %549 = vmatpush1.bf16.msra.mxu0 %v530
    %550 = vmatprep.subr.bf16.mxu0 0
    %551 = vmatpush1.bf16.msra.mxu0 %v531
    %552 = vmatprep.subr.bf16.mxu0 0
    %553 = vmatpush1.bf16.msra.mxu0 %v532
    %554 = vmatprep.subr.bf16.mxu0 0
    %555 = vmatpush1.bf16.msra.mxu0 %v533
    %556 = vmatprep.subr.bf16.mxu0 0
    %557 = vmatpush1.bf16.msra.mxu0 %v534
    %558 = vmatprep.subr.bf16.mxu0 0
    %559 = vmatpush1.bf16.msra.mxu0 %v535
    %560 = vmatprep.subr.bf16.mxu0 0
    %561 = vmatpush1.bf16.msra.mxu0 0
    %562 = vmatprep.subr.bf16.mxu0 0
    %563 = vmatpush1.bf16.msra.mxu0 0
    %564 = vmatprep.subr.bf16.mxu0 0
    %565 = vmatpush1.bf16.msra.mxu0 0
    %566 = vmatprep.subr.bf16.mxu0 0
    %567 = vmatpush1.bf16.msra.mxu0 0
    %568 = vmatprep.subr.bf16.mxu0 0
    %569 = vmatpush1.bf16.msra.mxu0 0
    %570 = vmatprep.subr.bf16.mxu0 0
    %571 = vmatpush1.bf16.msra.mxu0 0
    %572 = vmatprep.subr.bf16.mxu0 0
    %573 = vmatpush1.bf16.msra.mxu0 0
    %574 = vmatprep.subr.bf16.mxu0 0
    %575 = vmatpush1.bf16.msra.mxu0 0
    %576 = vmatprep.mubr.bf16.mxu0 0
    %577 = vmatmul.mubr.bf16.gmra.mrb[0].mxu0 %v495
    %v578 = vpop.f32.mrb[0].mxu0
    %v579 = vadd.f32 0.0, %v578
    %v580 = vpop.f32.mrb[0].mxu0
    %v581 = vpop.f32.mrb[0].mxu0
    %v582 = vpop.f32.mrb[0].mxu0
    %583 = vdwg.mxu0
    %v584 = vrot.slane %v579, 4
    %v585 = vadd.f32 %v579, %v584
    %v586 = vrot.slane %v585, 2
    %v587 = vadd.f32 %v585, %v586
    %v588 = vrot.slane %v587, 1
    %v589 = vadd.f32 %v587, %v588
    %v590 = vmul.f32 %v589, 0.125
    %v591 = vmul.f32 %v579, %v579
    %v592 = vrot.slane %v591, 4
    %v593 = vadd.f32 %v591, %v592
    %v594 = vrot.slane %v593, 2
    %v595 = vadd.f32 %v593, %v594
    %v596 = vrot.slane %v595, 1
    %v597 = vadd.f32 %v595, %v596
    %v598 = vmul.f32 %v597, 0.125
    %v599 = vmul.f32 %v590, %v590
    %v600 = vsub.f32 %v598, %v599
    %v601 = vmax.f32 %v600, 0.0
    %v602 = vadd.f32 %v601, 1e-05
    %v603 = vrsqrt.pop %v602
    %v604 = vmul.f32 %v78, %v603
    %v605 = vmul.f32 %v590, %v604
    %v607 = vrot.slane %v605, 7
    %v609 = vsub.f32 %v78, %v607
    %v610 = vlaneseq
    %v611 = vshrl.u32 %v610, 7
    %v612 = vsub.s32 6, %v611
    %v613 = vrot.slane %v604, %v612
    %v614 = vmul.f32 %v579, %v613
    %v615 = vlaneseq
    %v616 = vshrl.u32 %v615, 7
    %v617 = vsub.s32 7, %v616
    %v618 = vrot.slane %v609, %v617
    %v619 = vadd.f32 %v614, %v618
    %v620 = vmax.f32 %v619, 0.0
    %v621 = vpack.c.bf16 %v620, %v620
    %v622 = vld [vmem:[#allocation7] sm:$0xf]
    %v623 = vld [vmem:[#allocation7 + $0x4] sm:$0xf]
    %v624 = vld [vmem:[#allocation7 + $0x8] sm:$0xf]
    %v625 = vld [vmem:[#allocation7 + $0xc] sm:$0xf]
    %v626 = vld [vmem:[#allocation7 + $0x10] sm:$0xf]
    %v627 = vld [vmem:[#allocation7 + $0x14] sm:$0xf]
    %v628 = vld [vmem:[#allocation7 + $0x18] sm:$0xf]
    %v629 = vld [vmem:[#allocation7 + $0x1c] sm:$0xf]
    %v630 = vld [vmem:[#allocation7 + $0x20] sm:$0xf]
    %v631 = vld [vmem:[#allocation7 + $0x24] sm:$0xf]
    %v632 = vld [vmem:[#allocation7 + $0x28] sm:$0xf]
    %v633 = vld [vmem:[#allocation7 + $0x2c] sm:$0xf]
    %v634 = vld [vmem:[#allocation7 + $0x30] sm:$0xf]
    %v635 = vld [vmem:[#allocation7 + $0x34] sm:$0xf]
    %v636 = vld [vmem:[#allocation7 + $0x38] sm:$0xf]
    %v637 = vld [vmem:[#allocation7 + $0x3c] sm:$0xf]
    %v638 = vld [vmem:[%s5] sm:$0x1]
    %v640 = vlaneseq
    %v641 = vshrl.u32 %v640, 7
    %v642 = vsub.s32 0, %v641
    %v643 = vrot.slane %v638, %v642
    %v661 = vunpack.c.l.b16 %v622
    %v662 = vunpack.c.l.b16 %v623
    %v663 = vunpack.c.l.b16 %v624
    %v664 = vunpack.c.l.b16 %v625
    %v665 = vunpack.c.l.b16 %v626
    %v666 = vunpack.c.l.b16 %v627
    %v667 = vunpack.c.l.b16 %v628
    %v668 = vunpack.c.l.b16 %v629
    %v669 = vunpack.c.l.b16 %v630
    %v670 = vunpack.c.l.b16 %v631
    %v671 = vunpack.c.l.b16 %v632
    %v672 = vunpack.c.l.b16 %v633
    %v673 = vunpack.c.l.b16 %v634
    %v674 = vunpack.c.l.b16 %v635
    %v675 = vunpack.c.l.b16 %v636
    %v676 = vunpack.c.l.b16 %v637
    %v677 = vpack.c.b16 %v662, %v661
    %v678 = vpack.c.b16 %v664, %v663
    %v679 = vpack.c.b16 %v666, %v665
    %v680 = vpack.c.b16 %v668, %v667
    %v681 = vpack.c.b16 %v670, %v669
    %v682 = vpack.c.b16 %v672, %v671
    %v683 = vpack.c.b16 %v674, %v673
    %v684 = vpack.c.b16 %v676, %v675
    %693 = vmatprep.subr.bf16.mxu0 0
    %694 = vmatpush1.bf16.msra.mxu0 %v677
    %695 = vmatprep.subr.bf16.mxu0 0
    %696 = vmatpush1.bf16.msra.mxu0 %v678
    %697 = vmatprep.subr.bf16.mxu0 0
    %698 = vmatpush1.bf16.msra.mxu0 %v679
    %699 = vmatprep.subr.bf16.mxu0 0
    %700 = vmatpush1.bf16.msra.mxu0 %v680
    %701 = vmatprep.subr.bf16.mxu0 0
    %702 = vmatpush1.bf16.msra.mxu0 %v681
    %703 = vmatprep.subr.bf16.mxu0 0
    %704 = vmatpush1.bf16.msra.mxu0 %v682
    %705 = vmatprep.subr.bf16.mxu0 0
    %706 = vmatpush1.bf16.msra.mxu0 %v683
    %707 = vmatprep.subr.bf16.mxu0 0
    %708 = vmatpush1.bf16.msra.mxu0 %v684
    %709 = vmatprep.subr.bf16.mxu0 0
    %710 = vmatpush1.bf16.msra.mxu0 0
    %711 = vmatprep.subr.bf16.mxu0 0
    %712 = vmatpush1.bf16.msra.mxu0 0
    %713 = vmatprep.subr.bf16.mxu0 0
    %714 = vmatpush1.bf16.msra.mxu0 0
    %715 = vmatprep.subr.bf16.mxu0 0
    %716 = vmatpush1.bf16.msra.mxu0 0
    %717 = vmatprep.subr.bf16.mxu0 0
    %718 = vmatpush1.bf16.msra.mxu0 0
    %719 = vmatprep.subr.bf16.mxu0 0
    %720 = vmatpush1.bf16.msra.mxu0 0
    %721 = vmatprep.subr.bf16.mxu0 0
    %722 = vmatpush1.bf16.msra.mxu0 0
    %723 = vmatprep.subr.bf16.mxu0 0
    %724 = vmatpush1.bf16.msra.mxu0 0
    %725 = vmatprep.mubr.bf16.mxu0 0
    %726 = vmatmul.mubr.bf16.gmra.mrb[0].mxu0 %v621
    %v727 = vpop.f32.mrb[0].mxu0
    %v728 = vadd.f32 %v643, %v727
    %v729 = vpop.f32.mrb[0].mxu0
    %v730 = vpop.f32.mrb[0].mxu0
    %v731 = vpop.f32.mrb[0].mxu0
    %732 = vdwg.mxu0
    %733 = vst [vmem:[%s6] sm:$0xff] %v728
    // Predicated region
    $region42: #{mlp_encoder_forward.1} parent=1 // pred_check
      _
    $region43: #{mlp_encoder_forward.1} parent=1 // pred_check_branch
      %735 = sbr.rel (0) target = $region45
    $region44: #{mlp_encoder_forward.1} parent=1 // pred_region
      _
    $region45: #{mlp_encoder_forward.1} parent=1 // pred_fallthru
      _
    // Predicated region
    $region46: #{mlp_encoder_forward.1} parent=1 // pred_check
      _
    $region47: #{mlp_encoder_forward.1} parent=1 // pred_check_branch
      %737 = sbr.rel (0) target = $region49
    $region48: #{mlp_encoder_forward.1} parent=1 // pred_region
      _
    $region49: #{mlp_encoder_forward.1} parent=1 // pred_fallthru
      _
    %738 = vsyncpa [#allocation3], 1
    %739 = vsyncpa [#allocation5], 1
    %740 = vsyncpa [#allocation8], 1

</llo_original>
